<compile_context>
chip_gen: v7x
topology: tpu7x:2x2x1
jax: 0.10.0
libtpu: 0.0.40
codegen_flags: <defaults>
</compile_context>

<pallas_src>
import jax
import jax.numpy as jnp
from jax.experimental import pallas as pl
from jax.experimental.pallas import tpu as pltpu


def _qnet_kernel(x_ref, w1_ref, b1_ref, w2_ref, b2_ref, w3_ref, b3_ref, q_ref):
    # Layer 1: (tm, in_dim) @ (in_dim, 256); bf16 operands, f32 accumulation.
    h1 = jnp.dot(x_ref[...], w1_ref[...],
                 preferred_element_type=jnp.float32) + b1_ref[...]
    h1 = jnp.maximum(h1, 0.0)

    # Layer 2: 256x256 MXU matmul; cast activations to bf16, accumulate f32.
    h2 = jnp.dot(h1.astype(jnp.bfloat16), w2_ref[...],
                 preferred_element_type=jnp.float32) + b2_ref[...]
    h2 = jnp.maximum(h2, 0.0)

    # Layer 3 (out_features = 1): VPU multiply + XLU cross-lane reduce, written
    # lane-dense as a (1, 1, tm) row. b3 comes in as an SMEM scalar.
    q = jnp.sum(h2 * w3_ref[...], axis=-1) + b3_ref[0, 0]          # (tm,)
    q_ref[...] = q.reshape(q_ref.shape).astype(q_ref.dtype)


def _round_up(x, m):
    return ((x + m - 1) // m) * m


def soft_q_forward(state, action, params, tile_m=1024):
    """Pallas forward pass of SoftQNetwork.

    state:  (B, state_dim) or (state_dim,)
    action: (B, action_dim) or (action_dim,)
    params: dict with w1,b1,w2,b2,w3,b3 (weights (in, out), biases (1, out))
    returns q: (B, 1) float32
    """
    if state.ndim == 1:
        state = state[None, :]
    if action.ndim == 1:
        action = action[None, :]

    state = state.astype(jnp.float32)
    action = action.astype(jnp.float32)
    B = state.shape[0]

    w1, b1 = params["w1"], params["b1"]
    w2, b2 = params["w2"], params["b2"]
    w3, b3 = params["w3"], params["b3"]
    in_dim, hidden = w1.shape

    # One (B, in_dim) input instead of a split K=16/K=4 first layer: the concat
    # costs B*in_dim bytes of HBM, a whole extra MXU K-pass per tile is pricier.
    x = jnp.concatenate([state, action], axis=1).astype(jnp.bfloat16)

    # bf16 matmul operands (MXU-native on v5e/v6e/v7x); f32 accumulation in the
    # kernel via preferred_element_type. Layer-3 stays f32 on the VPU.
    w1_bf = w1.astype(jnp.bfloat16)
    w2_bf = w2.astype(jnp.bfloat16)
    w3_row = w3.reshape(1, hidden).astype(jnp.float32)
    b3_s = b3.reshape(1, 1).astype(jnp.float32)          # scalar -> SMEM

    # Batch tile: big enough to amortize per-step pipeline overhead, small
    # enough that grid >= 2 at large B so v7x's two TensorCores both get work.
    if B >= 128:
        tm = min(tile_m, _round_up(B, 128))
        if B >= 256:
            tm = min(tm, _round_up(pl.cdiv(B, 2), 128))
    else:
        tm = _round_up(max(B, 1), 8)
    num_tiles = pl.cdiv(B, tm)   # ragged last input block is masked by Pallas

    resident = lambda shape: pl.BlockSpec(shape, lambda i: (0, 0))

    q_rows = pl.pallas_call(
        _qnet_kernel,
        out_shape=jax.ShapeDtypeStruct((num_tiles, 1, tm), jnp.float32),
        grid=(num_tiles,),
        in_specs=[
            pl.BlockSpec((tm, in_dim), lambda i: (i, 0)),        # x tile (bf16)
            resident((in_dim, hidden)),                          # W1 (bf16)
            resident((1, hidden)),                               # b1 (f32)
            resident((hidden, hidden)),                          # W2 (bf16)
            resident((1, hidden)),                               # b2 (f32)
            resident((1, hidden)),                               # W3 row (f32)
            pl.BlockSpec(memory_space=pltpu.MemorySpace.SMEM),   # b3 scalar
        ],
        out_specs=pl.BlockSpec((1, 1, tm), lambda i: (i, 0, 0)),
        compiler_params=pltpu.CompilerParams(
            dimension_semantics=("parallel",)),   # v7x: shard batch over 2 TCs
    )(x, w1_bf, b1, w2_bf, b2, w3_row, b3_s)

    # Lane-dense (num_tiles, 1, tm) -> (B, 1); rows >= B were never valid.
    return q_rows.reshape(num_tiles * tm)[:B][:, None]


def init_params(key, state_dim, action_dim, hidden=256):
    """Deterministic init matching nn.Linear's U(-1/sqrt(fan_in), 1/sqrt(fan_in))."""
    def linear_init(k, fan_in, fan_out):
        kw, kb = jax.random.split(k)
        bound = 1.0 / jnp.sqrt(jnp.float32(fan_in))
        w = jax.random.uniform(kw, (fan_in, fan_out), jnp.float32, -bound, bound)
        b = jax.random.uniform(kb, (1, fan_out), jnp.float32, -bound, bound)
        return w, b

    k1, k2, k3 = jax.random.split(key, 3)
    in_dim = state_dim + action_dim
    w1, b1 = linear_init(k1, in_dim, hidden)
    w2, b2 = linear_init(k2, hidden, hidden)
    w3, b3 = linear_init(k3, hidden, 1)
    return {"w1": w1, "b1": b1, "w2": w2, "b2": b2, "w3": w3, "b3": b3}


def _reference_forward(state, action, p):
    x = jnp.concatenate([state, action], axis=1)
    h1 = jax.nn.relu(x @ p["w1"] + p["b1"])
    h2 = jax.nn.relu(h1 @ p["w2"] + p["b2"])
    return h2 @ p["w3"] + p["b3"]


if __name__ == "__main__":
    key = jax.random.PRNGKey(0)
    k_params, k_s1, k_a1, k_s2, k_a2 = jax.random.split(key, 5)

    state_dim, action_dim = 16, 4
    params = init_params(k_params, state_dim, action_dim)

    # Small batch: single grid step, tile rounded to the sublane multiple.
    batch = 4
    state = jax.random.normal(k_s1, (batch, state_dim), jnp.float32)
    action = jax.random.normal(k_a1, (batch, action_dim), jnp.float32)
    q = jax.block_until_ready(soft_q_forward(state, action, params))
    q_ref = _reference_forward(state, action, params)
    assert q.shape == (batch, 1)
    # bf16 matmul operands vs. f32 reference -> loosened tolerance.
    assert jnp.allclose(q, q_ref, atol=5e-2, rtol=5e-2), "mismatch (small batch)"

    # Larger, non-multiple batch: exercises the multi-tile grid and the ragged
    # final input block (no jnp.pad on the host side).
    big_batch = 300
    state_b = jax.random.normal(k_s2, (big_batch, state_dim), jnp.float32)
    action_b = jax.random.normal(k_a2, (big_batch, action_dim), jnp.float32)
    q_b = jax.block_until_ready(soft_q_forward(state_b, action_b, params))
    q_b_ref = _reference_forward(state_b, action_b, params)
    assert q_b.shape == (big_batch, 1)
    assert jnp.allclose(q_b, q_b_ref, atol=5e-2, rtol=5e-2), "mismatch (large batch)"

    print("KERNEL_OK")
</pallas_src>

<mosaic_0001>
module attributes {stable_mosaic.version = 11 : i64} {
  func.func @_qnet_kernel(%arg0: i32, %arg1: memref<8x20xbf16, #tpu.memory_space<vmem>>, %arg2: memref<20x256xbf16, #tpu.memory_space<vmem>>, %arg3: memref<1x256xf32, #tpu.memory_space<vmem>>, %arg4: memref<256x256xbf16, #tpu.memory_space<vmem>>, %arg5: memref<1x256xf32, #tpu.memory_space<vmem>>, %arg6: memref<1x256xf32, #tpu.memory_space<vmem>>, %arg7: memref<1x1xf32, #tpu.memory_space<smem>>, %arg8: memref<1x1x8xf32, #tpu.memory_space<vmem>>) attributes {dimension_semantics = [#tpu.dimension_semantics<parallel>], iteration_bounds = array<i64: 1>, scalar_prefetch = 0 : i64, scratch_operands = 0 : i64, tpu.core_type = #tpu.core_type<tc>, window_params = [{transform_indices = @transform_0, window_bounds = array<i64: 8, 20>}, {pipeline_mode = #tpu.pipeline_mode<synchronous>, transform_indices = @transform_1, window_bounds = array<i64: 20, 256>}, {pipeline_mode = #tpu.pipeline_mode<synchronous>, transform_indices = @transform_2, window_bounds = array<i64: 1, 256>}, {pipeline_mode = #tpu.pipeline_mode<synchronous>, transform_indices = @transform_3, window_bounds = array<i64: 256, 256>}, {pipeline_mode = #tpu.pipeline_mode<synchronous>, transform_indices = @transform_4, window_bounds = array<i64: 1, 256>}, {pipeline_mode = #tpu.pipeline_mode<synchronous>, transform_indices = @transform_5, window_bounds = array<i64: 1, 256>}, {transform_indices = @transform_6, window_bounds = array<i64: 1, 1>}, {transform_indices = @transform_7, window_bounds = array<i64: 1, 1, 8>}]} {
    %c0 = arith.constant 0 : index
    %c0_0 = arith.constant 0 : index
    %0 = vector.load %arg1[%c0, %c0_0] : memref<8x20xbf16, #tpu.memory_space<vmem>>, vector<8x20xbf16>
    %c0_1 = arith.constant 0 : index
    %c0_2 = arith.constant 0 : index
    %1 = vector.load %arg2[%c0_1, %c0_2] : memref<20x256xbf16, #tpu.memory_space<vmem>>, vector<20x256xbf16>
    %cst = arith.constant dense<0.000000e+00> : vector<8x256xf32>
    %2 = tpu.matmul %0, %1, %cst {dimension_numbers = #tpu.dot_dimension_numbers<[1], [0], [0], [1], [0, 0, 1, 1], [], []>} : vector<8x20xbf16>, vector<20x256xbf16>, vector<8x256xf32> -> vector<8x256xf32>
    %c0_3 = arith.constant 0 : index
    %c0_4 = arith.constant 0 : index
    %3 = vector.load %arg3[%c0_3, %c0_4] : memref<1x256xf32, #tpu.memory_space<vmem>>, vector<1x256xf32>
    %4 = vector.broadcast %3 : vector<1x256xf32> to vector<8x256xf32>
    %5 = arith.addf %2, %4 : vector<8x256xf32>
    %cst_5 = arith.constant 0.000000e+00 : f32
    %6 = vector.broadcast %cst_5 : f32 to vector<8x256xf32>
    %7 = arith.maximumf %5, %6 : vector<8x256xf32>
    %8 = arith.truncf %7 : vector<8x256xf32> to vector<8x256xbf16>
    %c0_6 = arith.constant 0 : index
    %c0_7 = arith.constant 0 : index
    %9 = vector.load %arg4[%c0_6, %c0_7] : memref<256x256xbf16, #tpu.memory_space<vmem>>, vector<256x256xbf16>
    %cst_8 = arith.constant dense<0.000000e+00> : vector<8x256xf32>
    %10 = tpu.matmul %8, %9, %cst_8 {dimension_numbers = #tpu.dot_dimension_numbers<[1], [0], [0], [1], [0, 0, 1, 1], [], []>} : vector<8x256xbf16>, vector<256x256xbf16>, vector<8x256xf32> -> vector<8x256xf32>
    %c0_9 = arith.constant 0 : index
    %c0_10 = arith.constant 0 : index
    %11 = vector.load %arg5[%c0_9, %c0_10] : memref<1x256xf32, #tpu.memory_space<vmem>>, vector<1x256xf32>
    %12 = vector.broadcast %11 : vector<1x256xf32> to vector<8x256xf32>
    %13 = arith.addf %10, %12 : vector<8x256xf32>
    %cst_11 = arith.constant 0.000000e+00 : f32
    %14 = vector.broadcast %cst_11 : f32 to vector<8x256xf32>
    %15 = arith.maximumf %13, %14 : vector<8x256xf32>
    %c0_12 = arith.constant 0 : index
    %c0_13 = arith.constant 0 : index
    %16 = vector.load %arg6[%c0_12, %c0_13] : memref<1x256xf32, #tpu.memory_space<vmem>>, vector<1x256xf32>
    %17 = vector.broadcast %16 : vector<1x256xf32> to vector<8x256xf32>
    %18 = arith.mulf %15, %17 : vector<8x256xf32>
    %cst_14 = arith.constant dense<0.000000e+00> : vector<8xf32>
    %19 = vector.multi_reduction <add>, %18, %cst_14 [1] : vector<8x256xf32> to vector<8xf32>
    %c0_15 = arith.constant 0 : index
    %c0_16 = arith.constant 0 : index
    %20 = memref.load %arg7[%c0_15, %c0_16] : memref<1x1xf32, #tpu.memory_space<smem>>
    %21 = vector.broadcast %20 : f32 to vector<8xf32>
    %22 = arith.addf %19, %21 : vector<8xf32>
    %23 = vector.shape_cast %22 : vector<8xf32> to vector<1x1x8xf32>
    %c0_17 = arith.constant 0 : index
    %c0_18 = arith.constant 0 : index
    %c0_19 = arith.constant 0 : index
    %24 = vector.load %arg8[%c0_17, %c0_18, %c0_19] : memref<1x1x8xf32, #tpu.memory_space<vmem>>, vector<1x1x8xf32>
    tpu.vector_store %arg8[%c0_17, %c0_18, %c0_19], %23 {strides = array<i32>} : memref<1x1x8xf32, #tpu.memory_space<vmem>>, vector<1x1x8xf32>,
    return
  }
  func.func @transform_0(%arg0: i32) -> (i32, i32) {
    %c0_i32 = arith.constant 0 : i32
    %c0_i32_0 = arith.constant 0 : i32
    return %arg0, %c0_i32 : i32, i32
  }
  func.func @transform_1(%arg0: i32) -> (i32, i32) {
    %c0_i32 = arith.constant 0 : i32
    %c0_i32_0 = arith.constant 0 : i32
    %c0_i32_1 = arith.constant 0 : i32
    return %c0_i32, %c0_i32_0 : i32, i32
  }
  func.func @transform_2(%arg0: i32) -> (i32, i32) {
    %c0_i32 = arith.constant 0 : i32
    %c0_i32_0 = arith.constant 0 : i32
    %c0_i32_1 = arith.constant 0 : i32
    return %c0_i32, %c0_i32_0 : i32, i32
  }
  func.func @transform_3(%arg0: i32) -> (i32, i32) {
    %c0_i32 = arith.constant 0 : i32
    %c0_i32_0 = arith.constant 0 : i32
    %c0_i32_1 = arith.constant 0 : i32
    return %c0_i32, %c0_i32_0 : i32, i32
  }
  func.func @transform_4(%arg0: i32) -> (i32, i32) {
    %c0_i32 = arith.constant 0 : i32
    %c0_i32_0 = arith.constant 0 : i32
    %c0_i32_1 = arith.constant 0 : i32
    return %c0_i32, %c0_i32_0 : i32, i32
  }
  func.func @transform_5(%arg0: i32) -> (i32, i32) {
    %c0_i32 = arith.constant 0 : i32
    %c0_i32_0 = arith.constant 0 : i32
    %c0_i32_1 = arith.constant 0 : i32
    return %c0_i32, %c0_i32_0 : i32, i32
  }
  func.func @transform_6(%arg0: i32) -> (i32, i32) {
    %c0_i32 = arith.constant 0 : i32
    %c0_i32_0 = arith.constant 0 : i32
    %c0_i32_1 = arith.constant 0 : i32
    return %c0_i32, %c0_i32_0 : i32, i32
  }
  func.func @transform_7(%arg0: i32) -> (i32, i32, i32) {
    %c0_i32 = arith.constant 0 : i32
    %c0_i32_0 = arith.constant 0 : i32
    %c0_i32_1 = arith.constant 0 : i32
    return %arg0, %c0_i32, %c0_i32_0 : i32, i32, i32
  }
}

</mosaic_0001>

<llo_original>
// kernel: tpu_custom_call.1
$region0: #{tpu_custom_call.1}
  #allocation0 [shape = 'u32[]', space=smem, size = 0x4, offset = 0x4, fixed_abs, tag = 'smem constant byte address 0x4 - core index']
  #allocation1 [shape = 'u32[144,128]{1,0:T(1,128)}', space=vmem, size = 0x12000, scoped, tag = 'internal scratch']
  #allocation2 [shape = 'f32[1,1]{1,0:T(1,128)S(6)}', space=smem, size = 0x200, scoped, tag = 'scoped memory for tpu_custom_call.1']
  %s0 = inlined_call_operand.vmem [shape: bf16[4,20], index: 0, kind: input, shape index: {}]
  %s1 = inlined_call_operand.hbm [shape: bf16[20,256], index: 1, kind: input, shape index: {}]
  %s2 = inlined_call_operand.vmem [shape: f32[1,256], index: 2, kind: input, shape index: {}]
  %s3 = inlined_call_operand.hbm [shape: bf16[256,256], index: 3, kind: input, shape index: {}]
  %s4 = inlined_call_operand.vmem [shape: f32[1,256], index: 4, kind: input, shape index: {}]
  %s5 = inlined_call_operand.vmem [shape: f32[1,256], index: 5, kind: input, shape index: {}]
  %s6 = inlined_call_operand.<no memory space> [shape: f32[1,1], index: 6, kind: input, shape index: {}]
  %s7 = inlined_call_operand.hbm [shape: f32[1,1,8], index: 7, kind: output, shape index: {}]
  %s8 = sld [smem:[#allocation0]]
  $region46: #{tpu_custom_call.1} parent=0
    _
  %s10 = ssub.s32 1, %s8
  %s11 = scalar_select 0, %s10, %s8
  %12 = sst [smem:[#allocation2]] %s6
  $region1: #{tpu_custom_call.1} parent=0
    #allocation3 [shape = 'u8[12288]{0}', space=vmem, size = 0x3000, scoped, tag = 'input window, operand 1, single buffered']
    #allocation4 [shape = 's32[1]{0}', space=sflag, size = 0x4, scoped, tag = 'scoped memory for tpu_custom_call.1']
    #allocation5 [shape = 's32[1]{0}', space=sflag, size = 0x4, scoped, tag = 'scoped memory for tpu_custom_call.1']
    #allocation6 [shape = 'u8[131072]{0}', space=vmem, size = 0x20000, scoped, tag = 'input window, operand 3, single buffered']
    #allocation7 [shape = 's32[1]{0}', space=sflag, size = 0x4, scoped, tag = 'scoped memory for tpu_custom_call.1']
    #allocation8 [shape = 'u8[512]{0}', space=vmem, size = 0x400, scoped, tag = 'output window, operand 0, single buffered']
    %13 = vsyncpa [#allocation4], 0
    %14 = vsyncpa [#allocation7], 0
    %15 = vsyncpa [#allocation5], 0
    // Predicated region
    $region2: #{tpu_custom_call.1} parent=1 // pred_check
      _
    $region3: #{tpu_custom_call.1} parent=1 // pred_check_branch
      %17 = sbr.rel (0) target = $region5
    $region4: #{tpu_custom_call.1} parent=1 // pred_region
      _
    $region5: #{tpu_custom_call.1} parent=1 // pred_fallthru
      _
    // Predicated region
    $region6: #{tpu_custom_call.1} parent=1 // pred_check
      _
    $region7: #{tpu_custom_call.1} parent=1 // pred_check_branch
      %19 = sbr.rel (0) target = $region9
    $region8: #{tpu_custom_call.1} parent=1 // pred_region
      %s21 = ssub.s32 384, 384
      %22 = vsyncadd [#allocation4], %s21
      %s23 = sshll.u32 [#allocation3], 4
      %s24 = int_to_ptr.vmem [resolvable:$true] %s23
      %29 = dma.hbm_to_vmem [thread:$0]  %s1, 384, %s24, [#allocation4], 128, 128, 8
    $region9: #{tpu_custom_call.1} parent=1 // pred_fallthru
      _
    // Predicated region
    $region10: #{tpu_custom_call.1} parent=1 // pred_check
      _
    $region11: #{tpu_custom_call.1} parent=1 // pred_check_branch
      %31 = sbr.rel (0) target = $region13
    $region12: #{tpu_custom_call.1} parent=1 // pred_region
      _
    $region13: #{tpu_custom_call.1} parent=1 // pred_fallthru
      _
    // Predicated region
    $region14: #{tpu_custom_call.1} parent=1 // pred_check
      _
    $region15: #{tpu_custom_call.1} parent=1 // pred_check_branch
      %33 = sbr.rel (0) target = $region17
    $region16: #{tpu_custom_call.1} parent=1 // pred_region
      %s35 = ssub.s32 4096, 4096
      %36 = vsyncadd [#allocation7], %s35
      %s37 = sshll.u32 [#allocation6], 4
      %s38 = int_to_ptr.vmem [resolvable:$true] %s37
      %43 = dma.hbm_to_vmem [thread:$0]  %s3, 4096, %s38, [#allocation7], 128, 128, 8
    $region17: #{tpu_custom_call.1} parent=1 // pred_fallthru
      _
    // Predicated region
    $region18: #{tpu_custom_call.1} parent=1 // pred_check
      _
    $region19: #{tpu_custom_call.1} parent=1 // pred_check_branch
      %45 = sbr.rel (0) target = $region21
    $region20: #{tpu_custom_call.1} parent=1 // pred_region
      _
    $region21: #{tpu_custom_call.1} parent=1 // pred_fallthru
      _
    // Predicated region
    $region22: #{tpu_custom_call.1} parent=1 // pred_check
      _
    $region23: #{tpu_custom_call.1} parent=1 // pred_check_branch
      %47 = sbr.rel (0) target = $region25
    $region24: #{tpu_custom_call.1} parent=1 // pred_region
      _
    $region25: #{tpu_custom_call.1} parent=1 // pred_fallthru
      _
    // Predicated region
    $region26: #{tpu_custom_call.1} parent=1 // pred_check
      _
    $region27: #{tpu_custom_call.1} parent=1 // pred_check_branch
      %49 = sbr.rel (0) target = $region29
    $region28: #{tpu_custom_call.1} parent=1 // pred_region
      _
    $region29: #{tpu_custom_call.1} parent=1 // pred_fallthru
      _
    // Predicated region
    $region30: #{tpu_custom_call.1} parent=1 // pred_check
      _
    $region31: #{tpu_custom_call.1} parent=1 // pred_check_branch
      %51 = sbr.rel (0) target = $region33
    $region32: #{tpu_custom_call.1} parent=1 // pred_region
      %52 = dma.done [#allocation4], 384
    $region33: #{tpu_custom_call.1} parent=1 // pred_fallthru
      _
    // Predicated region
    $region34: #{tpu_custom_call.1} parent=1 // pred_check
      _
    $region35: #{tpu_custom_call.1} parent=1 // pred_check_branch
      %54 = sbr.rel (0) target = $region37
    $region36: #{tpu_custom_call.1} parent=1 // pred_region
      %55 = dma.done [#allocation7], 4096
    $region37: #{tpu_custom_call.1} parent=1 // pred_fallthru
      _
    %v57 = vld [vmem:[%s0] sm:$0x3]
    %v58 = vld [vmem:[%s0 + $0x2] sm:$0x3]
    %v59 = vld [vmem:[#allocation3] sm:$0xff]
    %v60 = vld [vmem:[#allocation3 + $0x8] sm:$0xff]
    %v61 = vld [vmem:[#allocation3 + $0x10] sm:$0x33]
    %v62 = vld [vmem:[%s2] sm:$0x3]
    %v64 = vlaneseq
    %v65 = vshrl.u32 %v64, 7
    %v66 = vsub.s32 0, %v65
    %v67 = vrot.slane %v62, %v66
    %v68 = vlaneseq
    %v69 = vshrl.u32 %v68, 7
    %v70 = vsub.s32 1, %v69
    %v71 = vrot.slane %v62, %v70
    %v76 = vcombine.low %v57, %v58
    %v78 = vunpack.c.l.s4 1983009808
    %v79 = vunpack.c.0.s8 %v78
    %v80 = vlaneseq
    %v81 = vshrl.u32 %v80, 7
    %v82 = vsub.s32 %v79, %v81
    %v83 = vrot.slane %v76, %v82
    %v87 = vunpack.c.l.b16 %v59
    %v88 = vunpack.c.h.b16 %v59
    %v89 = vunpack.c.l.b16 %v60
    %v90 = vunpack.c.h.b16 %v60
    %v91 = vunpack.c.l.b16 %v61
    %v92 = vunpack.c.h.b16 %v61
    %v93 = vpack.c.b16 %v89, %v87
    %v94 = vpack.c.b16 %v90, %v88
    %v95 = vpack.c.b16 %v91, %v91
    %v96 = vpack.c.b16 %v92, %v92
    %vm99 = vcmask 162816
    %v101 = vsel %vm99, %v83, 0
    %vm103 = vcmask 1041408
    %v105 = vsel %vm103, %v95, 0
    %v108 = vsel %vm103, %v96, 0
    %110 = vmatprep.subr.bf16.mxu0 %v94
    %111 = vmatpush1.bf16.msra.mxu0 %v93
    %112 = vmatprep.subr.bf16.mxu0 %v108
    %113 = vmatpush1.bf16.msra.mxu0 %v105
    %114 = vmatprep.subr.bf16.mxu0 0
    %115 = vmatpush1.bf16.msra.mxu0 0
    %116 = vmatprep.subr.bf16.mxu0 0
    %117 = vmatpush1.bf16.msra.mxu0 0
    %118 = vmatprep.subr.bf16.mxu0 0
    %119 = vmatpush1.bf16.msra.mxu0 0
    %120 = vmatprep.subr.bf16.mxu0 0
    %121 = vmatpush1.bf16.msra.mxu0 0
    %122 = vmatprep.subr.bf16.mxu0 0
    %123 = vmatpush1.bf16.msra.mxu0 0
    %124 = vmatprep.subr.bf16.mxu0 0
    %125 = vmatpush1.bf16.msra.mxu0 0
    %126 = vmatprep.subr.bf16.mxu0 0
    %127 = vmatpush1.bf16.msra.mxu0 0
    %128 = vmatprep.subr.bf16.mxu0 0
    %129 = vmatpush1.bf16.msra.mxu0 0
    %130 = vmatprep.subr.bf16.mxu0 0
    %131 = vmatpush1.bf16.msra.mxu0 0
    %132 = vmatprep.subr.bf16.mxu0 0
    %133 = vmatpush1.bf16.msra.mxu0 0
    %134 = vmatprep.subr.bf16.mxu0 0
    %135 = vmatpush1.bf16.msra.mxu0 0
    %136 = vmatprep.subr.bf16.mxu0 0
    %137 = vmatpush1.bf16.msra.mxu0 0
    %138 = vmatprep.subr.bf16.mxu0 0
    %139 = vmatpush1.bf16.msra.mxu0 0
    %140 = vmatprep.subr.bf16.mxu0 0
    %141 = vmatpush1.bf16.msra.mxu0 0
    %142 = vmatprep.mubr.bf16.mxu0 0
    %143 = vmatmul.mubr.bf16.gmra.mrb[0].mxu0 %v101
    %v144 = vpop.f32.mrb[0].mxu0
    %v145 = vadd.f32 %v67, %v144
    %v146 = vpop.f32.mrb[0].mxu0
    %v147 = vadd.f32 %v71, %v146
    %v148 = vpop.f32.mrb[0].mxu0
    %v149 = vpop.f32.mrb[0].mxu0
    %150 = vdwg.mxu0
    %v151 = vmax.f32 %v145, 0.0
    %v152 = vmax.f32 %v147, 0.0
    %v153 = vpack.c.bf16 %v151, %v151
    %v154 = vpack.c.bf16 %v152, %v152
    %v155 = vld [vmem:[#allocation6] sm:$0xff]
    %v156 = vld [vmem:[#allocation6 + $0x8] sm:$0xff]
    %v157 = vld [vmem:[#allocation6 + $0x10] sm:$0xff]
    %v158 = vld [vmem:[#allocation6 + $0x18] sm:$0xff]
    %v159 = vld [vmem:[#allocation6 + $0x20] sm:$0xff]
    %v160 = vld [vmem:[#allocation6 + $0x28] sm:$0xff]
    %v161 = vld [vmem:[#allocation6 + $0x30] sm:$0xff]
    %v162 = vld [vmem:[#allocation6 + $0x38] sm:$0xff]
    %v163 = vld [vmem:[#allocation6 + $0x40] sm:$0xff]
    %v164 = vld [vmem:[#allocation6 + $0x48] sm:$0xff]
    %v165 = vld [vmem:[#allocation6 + $0x50] sm:$0xff]
    %v166 = vld [vmem:[#allocation6 + $0x58] sm:$0xff]
    %v167 = vld [vmem:[#allocation6 + $0x60] sm:$0xff]
    %v168 = vld [vmem:[#allocation6 + $0x68] sm:$0xff]
    %v169 = vld [vmem:[#allocation6 + $0x70] sm:$0xff]
    %v170 = vld [vmem:[#allocation6 + $0x78] sm:$0xff]
    %v171 = vld [vmem:[#allocation6 + $0x80] sm:$0xff]
    %v172 = vld [vmem:[#allocation6 + $0x88] sm:$0xff]
    %v173 = vld [vmem:[#allocation6 + $0x90] sm:$0xff]
    %v174 = vld [vmem:[#allocation6 + $0x98] sm:$0xff]
    %v175 = vld [vmem:[#allocation6 + $0xa0] sm:$0xff]
    %v176 = vld [vmem:[#allocation6 + $0xa8] sm:$0xff]
    %v177 = vld [vmem:[#allocation6 + $0xb0] sm:$0xff]
    %v178 = vld [vmem:[#allocation6 + $0xb8] sm:$0xff]
    %v179 = vld [vmem:[#allocation6 + $0xc0] sm:$0xff]
    %v180 = vld [vmem:[#allocation6 + $0xc8] sm:$0xff]
    %v181 = vld [vmem:[#allocation6 + $0xd0] sm:$0xff]
    %v182 = vld [vmem:[#allocation6 + $0xd8] sm:$0xff]
    %v183 = vld [vmem:[#allocation6 + $0xe0] sm:$0xff]
    %v184 = vld [vmem:[#allocation6 + $0xe8] sm:$0xff]
    %v185 = vld [vmem:[#allocation6 + $0xf0] sm:$0xff]
    %v186 = vld [vmem:[#allocation6 + $0xf8] sm:$0xff]
    %v187 = vld [vmem:[%s4] sm:$0x3]
    %v189 = vlaneseq
    %v190 = vshrl.u32 %v189, 7
    %v191 = vsub.s32 0, %v190
    %v192 = vrot.slane %v187, %v191
    %v193 = vlaneseq
    %v194 = vshrl.u32 %v193, 7
    %v195 = vsub.s32 1, %v194
    %v196 = vrot.slane %v187, %v195
    %v231 = vunpack.c.l.b16 %v155
    %v232 = vunpack.c.h.b16 %v155
    %v233 = vunpack.c.l.b16 %v156
    %v234 = vunpack.c.h.b16 %v156
    %v235 = vunpack.c.l.b16 %v157
    %v236 = vunpack.c.h.b16 %v157
    %v237 = vunpack.c.l.b16 %v158
    %v238 = vunpack.c.h.b16 %v158
    %v239 = vunpack.c.l.b16 %v159
    %v240 = vunpack.c.h.b16 %v159
    %v241 = vunpack.c.l.b16 %v160
    %v242 = vunpack.c.h.b16 %v160
    %v243 = vunpack.c.l.b16 %v161
    %v244 = vunpack.c.h.b16 %v161
    %v245 = vunpack.c.l.b16 %v162
    %v246 = vunpack.c.h.b16 %v162
    %v247 = vunpack.c.l.b16 %v163
    %v248 = vunpack.c.h.b16 %v163
    %v249 = vunpack.c.l.b16 %v164
    %v250 = vunpack.c.h.b16 %v164
    %v251 = vunpack.c.l.b16 %v165
    %v252 = vunpack.c.h.b16 %v165
    %v253 = vunpack.c.l.b16 %v166
    %v254 = vunpack.c.h.b16 %v166
    %v255 = vunpack.c.l.b16 %v167
    %v256 = vunpack.c.h.b16 %v167
    %v257 = vunpack.c.l.b16 %v168
    %v258 = vunpack.c.h.b16 %v168
    %v259 = vunpack.c.l.b16 %v169
    %v260 = vunpack.c.h.b16 %v169
    %v261 = vunpack.c.l.b16 %v170
    %v262 = vunpack.c.h.b16 %v170
    %v263 = vunpack.c.l.b16 %v171
    %v264 = vunpack.c.h.b16 %v171
    %v265 = vunpack.c.l.b16 %v172
    %v266 = vunpack.c.h.b16 %v172
    %v267 = vunpack.c.l.b16 %v173
    %v268 = vunpack.c.h.b16 %v173
    %v269 = vunpack.c.l.b16 %v174
    %v270 = vunpack.c.h.b16 %v174
    %v271 = vunpack.c.l.b16 %v175
    %v272 = vunpack.c.h.b16 %v175
    %v273 = vunpack.c.l.b16 %v176
    %v274 = vunpack.c.h.b16 %v176
    %v275 = vunpack.c.l.b16 %v177
    %v276 = vunpack.c.h.b16 %v177
    %v277 = vunpack.c.l.b16 %v178
    %v278 = vunpack.c.h.b16 %v178
    %v279 = vunpack.c.l.b16 %v179
    %v280 = vunpack.c.h.b16 %v179
    %v281 = vunpack.c.l.b16 %v180
    %v282 = vunpack.c.h.b16 %v180
    %v283 = vunpack.c.l.b16 %v181
    %v284 = vunpack.c.h.b16 %v181
    %v285 = vunpack.c.l.b16 %v182
    %v286 = vunpack.c.h.b16 %v182
    %v287 = vunpack.c.l.b16 %v183
    %v288 = vunpack.c.h.b16 %v183
    %v289 = vunpack.c.l.b16 %v184
    %v290 = vunpack.c.h.b16 %v184
    %v291 = vunpack.c.l.b16 %v185
    %v292 = vunpack.c.h.b16 %v185
    %v293 = vunpack.c.l.b16 %v186
    %v294 = vunpack.c.h.b16 %v186
    %v295 = vpack.c.b16 %v233, %v231
    %v296 = vpack.c.b16 %v234, %v232
    %v297 = vpack.c.b16 %v237, %v235
    %v298 = vpack.c.b16 %v238, %v236
    %v299 = vpack.c.b16 %v241, %v239
    %v300 = vpack.c.b16 %v242, %v240
    %v301 = vpack.c.b16 %v245, %v243
    %v302 = vpack.c.b16 %v246, %v244
    %v303 = vpack.c.b16 %v249, %v247
    %v304 = vpack.c.b16 %v250, %v248
    %v305 = vpack.c.b16 %v253, %v251
    %v306 = vpack.c.b16 %v254, %v252
    %v307 = vpack.c.b16 %v257, %v255
    %v308 = vpack.c.b16 %v258, %v256
    %v309 = vpack.c.b16 %v261, %v259
    %v310 = vpack.c.b16 %v262, %v260
    %v311 = vpack.c.b16 %v265, %v263
    %v312 = vpack.c.b16 %v266, %v264
    %v313 = vpack.c.b16 %v269, %v267
    %v314 = vpack.c.b16 %v270, %v268
    %v315 = vpack.c.b16 %v273, %v271
    %v316 = vpack.c.b16 %v274, %v272
    %v317 = vpack.c.b16 %v277, %v275
    %v318 = vpack.c.b16 %v278, %v276
    %v319 = vpack.c.b16 %v281, %v279
    %v320 = vpack.c.b16 %v282, %v280
    %v321 = vpack.c.b16 %v285, %v283
    %v322 = vpack.c.b16 %v286, %v284
    %v323 = vpack.c.b16 %v289, %v287
    %v324 = vpack.c.b16 %v290, %v288
    %v325 = vpack.c.b16 %v293, %v291
    %v326 = vpack.c.b16 %v294, %v292
    %359 = vmatprep.subr.bf16.mxu0 %v296
    %360 = vmatpush1.bf16.msra.mxu0 %v295
    %361 = vmatprep.subr.bf16.mxu0 %v298
    %362 = vmatpush1.bf16.msra.mxu0 %v297
    %363 = vmatprep.subr.bf16.mxu0 %v300
    %364 = vmatpush1.bf16.msra.mxu0 %v299
    %365 = vmatprep.subr.bf16.mxu0 %v302
    %366 = vmatpush1.bf16.msra.mxu0 %v301
    %367 = vmatprep.subr.bf16.mxu0 %v304
    %368 = vmatpush1.bf16.msra.mxu0 %v303
    %369 = vmatprep.subr.bf16.mxu0 %v306
    %370 = vmatpush1.bf16.msra.mxu0 %v305
    %371 = vmatprep.subr.bf16.mxu0 %v308
    %372 = vmatpush1.bf16.msra.mxu0 %v307
    %373 = vmatprep.subr.bf16.mxu0 %v310
    %374 = vmatpush1.bf16.msra.mxu0 %v309
    %375 = vmatprep.subr.bf16.mxu0 %v312
    %376 = vmatpush1.bf16.msra.mxu0 %v311
    %377 = vmatprep.subr.bf16.mxu0 %v314
    %378 = vmatpush1.bf16.msra.mxu0 %v313
    %379 = vmatprep.subr.bf16.mxu0 %v316
    %380 = vmatpush1.bf16.msra.mxu0 %v315
    %381 = vmatprep.subr.bf16.mxu0 %v318
    %382 = vmatpush1.bf16.msra.mxu0 %v317
    %383 = vmatprep.subr.bf16.mxu0 %v320
    %384 = vmatpush1.bf16.msra.mxu0 %v319
    %385 = vmatprep.subr.bf16.mxu0 %v322
    %386 = vmatpush1.bf16.msra.mxu0 %v321
    %387 = vmatprep.subr.bf16.mxu0 %v324
    %388 = vmatpush1.bf16.msra.mxu0 %v323
    %389 = vmatprep.subr.bf16.mxu0 %v326
    %390 = vmatpush1.bf16.msra.mxu0 %v325
    %391 = vmatprep.mubr.bf16.mxu0 %v154
    %392 = vmatmul.mubr.bf16.gmra.mrb[0].mxu0 %v153
    %v393 = vpop.f32.mrb[0].mxu0
    %v394 = vadd.f32 %v192, %v393
    %v395 = vpop.f32.mrb[0].mxu0
    %v396 = vadd.f32 %v196, %v395
    %v397 = vpop.f32.mrb[0].mxu0
    %v398 = vpop.f32.mrb[0].mxu0
    %399 = vdwg.mxu0
    %v400 = vmax.f32 %v394, 0.0
    %v401 = vmax.f32 %v396, 0.0
    %v402 = vld [vmem:[%s5] sm:$0x3]
    %v404 = vlaneseq
    %v405 = vshrl.u32 %v404, 7
    %v406 = vsub.s32 0, %v405
    %v407 = vrot.slane %v402, %v406
    %v408 = vlaneseq
    %v409 = vshrl.u32 %v408, 7
    %v410 = vsub.s32 1, %v409
    %v411 = vrot.slane %v402, %v410
    %v414 = vmul.f32 %v400, %v407
    %v415 = vmul.f32 %v401, %v411
    %v416 = vadd.f32 %v414, %v415
    %417 = vadd.xlane.f32.xlu0 %v416
    %v418 = vpop.xlane.xlu0 %417
    %s419 = sld [smem:[#allocation2]]
    %v420 = vstv %s419
    %v421 = vadd.f32 %v418, %v420
    %v423 = vlaneseq
    %v424 = vand.u32 %v423, 127
    %v425 = vlaneseq
    %v426 = vshrl.u32 %v425, 7
    %v427 = vsub.s32 %v424, %v426
    %v428 = vrot.slane %v421, %v427
    %vm430 = vcmask 57344
    %431 = vst.msk [vmem:[#allocation8] sm:$0x1] %vm430, %v428
    // Predicated region
    $region38: #{tpu_custom_call.1} parent=1 // pred_check
      _
    $region39: #{tpu_custom_call.1} parent=1 // pred_check_branch
      %433 = sbr.rel (0) target = $region41
    $region40: #{tpu_custom_call.1} parent=1 // pred_region
      %s435 = ssub.s32 16, 16
      %436 = vsyncadd [#allocation5], %s435
      %s438 = sshll.u32 [#allocation8], 4
      %s439 = int_to_ptr.vmem [resolvable:$true] %s438
      %441 = dma.vmem_to_hbm [thread:$0]  %s439, 16, %s7, [#allocation5]
    $region41: #{tpu_custom_call.1} parent=1 // pred_fallthru
      _
    // Predicated region
    $region42: #{tpu_custom_call.1} parent=1 // pred_check
      _
    $region43: #{tpu_custom_call.1} parent=1 // pred_check_branch
      %443 = sbr.rel (0) target = $region45
    $region44: #{tpu_custom_call.1} parent=1 // pred_region
      %444 = dma.done [#allocation5], 16
    $region45: #{tpu_custom_call.1} parent=1 // pred_fallthru
      _
    %445 = vsyncpa [#allocation4], 1
    %446 = vsyncpa [#allocation7], 1
    %447 = vsyncpa [#allocation5], 1

</llo_original>
